<compile_context>
chip_gen: v6e
topology: v6e:2x2x1
jax: 0.10.0
libtpu: 0.0.40
codegen_flags: <defaults>
</compile_context>

<pallas_src>
import jax
import jax.numpy as jnp
from jax.experimental import pallas as pl
from jax.experimental.pallas import tpu as pltpu


def _round_up(v: int, m: int) -> int:
    return ((v + m - 1) // m) * m


def _vmem_capacity_bytes() -> int:
    """Best-effort physical-VMEM query; conservative (v7x, 64 MiB) on failure."""
    try:
        info = pltpu.get_tpu_info()
        cap = int(getattr(info, "vmem_capacity_bytes", 0) or 0)
        if cap > 0:
            return cap
    except Exception:
        pass
    return 64 << 20


def _chomp_copy_kernel(x_ref, o_ref):
    # Pure block copy: the chomp is expressed by the BlockSpec index_maps.
    o_ref[...] = x_ref[...]


def _chomp_slice_kernel(x_ref, o_ref):
    # Short-sequence fallback (L_out < 128): per-row-tile static prefix slice.
    o_ref[...] = x_ref[:, : o_ref.shape[-1]]


def chomp1d(
    x: jax.Array,
    chomp_size: int,
    *,
    block_rows: int = 512,          # sublane tile (multiple of 32 keeps bf16/int8 packing clean)
    block_lanes: int | None = None,  # lane tile; default 2048 (v7x) / 4096 (v5e/v6e)
    min_pallas_bytes: int = 0,       # below this size, use a plain XLA slice (fusable into the conv)
) -> jax.Array:
    """Pallas TPU Chomp1d: returns x[:, :, :-chomp_size]."""
    assert x.ndim == 3, "expected (N, C, L) input"
    n, c, l = x.shape
    assert 0 <= chomp_size < l, "chomp_size must be in [0, L)"
    if chomp_size == 0:
        # Treated as a no-op (literal PyTorch `x[:, :, :-0]` is a degenerate empty slice).
        return x
    l_out = l - chomp_size
    nc = n * c
    itemsize = jnp.dtype(x.dtype).itemsize

    # Fast path for tiny tensors: a standalone kernel launch is pure overhead and
    # XLA can fuse this slice into the producing conv of a real TCN.
    if nc * l * itemsize < min_pallas_bytes:
        return x[:, :, :l_out]

    # Generation-aware budgets.
    vmem_cap = _vmem_capacity_bytes()
    small_vmem = vmem_cap <= (64 << 20)                 # v7x-class: 64 MiB per TensorCore
    limit_cap = (52 << 20) if small_vmem else (96 << 20)
    if block_lanes is None:
        block_lanes = 2048 if small_vmem else 4096      # ~4 MiB vs ~8 MiB f32 tiles

    # Sanitize tile knobs.
    block_rows = max(8, (block_rows // 32) * 32) if block_rows >= 32 else 8
    block_lanes = max(128, (block_lanes // 128) * 128)

    # (N, C, L) is contiguous row-major -> flattening batch & channel is free and
    # gives a clean 2D (rows, time) problem for (8, 128) tiling.
    x2 = x.reshape(nc, l)

    if l_out >= 128:
        # ---------------- Tiled path (realistic shapes) ----------------
        # Row tile: full extent (always legal) or a multiple of 8.
        tr = nc if nc <= block_rows else block_rows
        # Balanced lane tile: multiple of 128, sized so the last tile is not
        # nearly empty (avoids a full extra DMA + masked vst.msk for a few lanes).
        n_lane_blocks = pl.cdiv(l_out, block_lanes)
        tl = min(block_lanes, _round_up(pl.cdiv(l_out, n_lane_blocks), 128))

        # Shrink tile so 2x input + 2x output double-buffers fit the scoped budget.
        while 4 * tr * tl * itemsize + (4 << 20) > limit_cap and tl > 128:
            tl = max(128, _round_up(tl // 2, 128))
        while 4 * tr * tl * itemsize + (4 << 20) > limit_cap and tr > 8:
            tr = max(8, _round_up(tr // 2, 8))

        # v7x megacore: if the lane grid collapsed to a single block, split rows so
        # both TensorCores get work on a "parallel" axis.
        if pl.cdiv(l_out, tl) == 1 and tr == nc and nc > 8:
            tr = min(tr, max(8, _round_up(pl.cdiv(nc, 2), 8)))

        grid = (pl.cdiv(nc, tr), pl.cdiv(l_out, tl))
        tile_bytes = tr * tl * itemsize
        vmem_limit = int(min(max(6 * tile_bytes + (4 << 20), 16 << 20), limit_cap))

        out2 = pl.pallas_call(
            _chomp_copy_kernel,
            out_shape=jax.ShapeDtypeStruct((nc, l_out), x.dtype),
            grid_spec=pltpu.PrefetchScalarGridSpec(
                num_scalar_prefetch=0,
                grid=grid,
                # Identical tile shape & index_map for input and output: the
                # chomped tail is only touched by the (padded) final lane tile.
                in_specs=[pl.BlockSpec((tr, tl), lambda i, j: (i, j))],
                out_specs=pl.BlockSpec((tr, tl), lambda i, j: (i, j)),
            ),
            compiler_params=pltpu.CompilerParams(
                dimension_semantics=("parallel", "parallel"),
                vmem_limit_bytes=vmem_limit,
            ),
            cost_estimate=pl.CostEstimate(
                flops=0,
                transcendentals=0,
                bytes_accessed=2 * nc * l_out * itemsize,  # pure bandwidth op
            ),
        )(x2)
    else:
        # ---------------- Short-sequence fallback (L_out < 128), row-tiled ----------------
        # Lane dims equal the full array extents (legal under the (8,128) rule);
        # rows are tiled so large N*C still pipelines and never overflows VMEM.
        tr = nc if nc <= block_rows else block_rows
        while 4 * tr * (l + l_out) * itemsize + (4 << 20) > limit_cap and tr > 8:
            tr = max(8, _round_up(tr // 2, 8))

        grid = (pl.cdiv(nc, tr),)
        step_bytes = tr * (l + l_out) * itemsize
        vmem_limit = int(min(max(6 * step_bytes + (4 << 20), 16 << 20), limit_cap))

        out2 = pl.pallas_call(
            _chomp_slice_kernel,
            out_shape=jax.ShapeDtypeStruct((nc, l_out), x.dtype),
            grid_spec=pltpu.PrefetchScalarGridSpec(
                num_scalar_prefetch=0,
                grid=grid,
                in_specs=[pl.BlockSpec((tr, l), lambda i: (i, 0))],
                out_specs=pl.BlockSpec((tr, l_out), lambda i: (i, 0)),
            ),
            compiler_params=pltpu.CompilerParams(
                dimension_semantics=("parallel",),
                vmem_limit_bytes=vmem_limit,
            ),
            cost_estimate=pl.CostEstimate(
                flops=0,
                transcendentals=0,
                bytes_accessed=nc * (l + l_out) * itemsize,
            ),
        )(x2)

    # TODO(synk): optional HBM->HBM strided make_async_copy path (memory_space=pl.ANY)
    # for very large tensors to skip VMEM staging entirely.
    return out2.reshape(n, c, l_out)


if __name__ == "__main__":
    key = jax.random.PRNGKey(0)
    k1, k2 = jax.random.split(key)
    chomp_size = 3  # Chomp1d has no parameters; chomp_size is the only (static) config.

    # Small (N, C, L) input -> exercises the row-tiled short-sequence fallback.
    x_small = jax.random.normal(k1, (2, 4, 16), dtype=jnp.float32)
    out_small = jax.block_until_ready(chomp1d(x_small, chomp_size))
    ref_small = x_small[:, :, :-chomp_size]
    assert out_small.shape == (2, 4, 16 - chomp_size)
    assert out_small.dtype == x_small.dtype
    assert jnp.array_equal(out_small, ref_small)

    # Longer sequence -> exercises the tiled, index-map-chomp path (balanced lane
    # tile + megacore row split), still tiny in absolute size.
    x_big = jax.random.normal(k2, (2, 8, 400), dtype=jnp.float32)
    out_big = jax.block_until_ready(chomp1d(x_big, chomp_size))
    ref_big = x_big[:, :, :-chomp_size]
    assert out_big.shape == (2, 8, 400 - chomp_size)
    assert out_big.dtype == x_big.dtype
    assert jnp.array_equal(out_big, ref_big)

    print("KERNEL_OK")
</pallas_src>

<mosaic_0001>
module attributes {stable_mosaic.version = 11 : i64} {
  func.func @_chomp_slice_kernel(%arg0: i32, %arg1: memref<8x16xf32, #tpu.memory_space<vmem>>, %arg2: memref<8x13xf32, #tpu.memory_space<vmem>>) attributes {dimension_semantics = [#tpu.dimension_semantics<parallel>], iteration_bounds = array<i64: 1>, scalar_prefetch = 0 : i64, scratch_operands = 0 : i64, tpu.core_type = #tpu.core_type<tc>, window_params = [{transform_indices = @transform_0, window_bounds = array<i64: 8, 16>}, {transform_indices = @transform_1, window_bounds = array<i64: 8, 13>}]} {
    %c0 = arith.constant 0 : index
    %c0_0 = arith.constant 0 : index
    %0 = vector.load %arg1[%c0, %c0_0] : memref<8x16xf32, #tpu.memory_space<vmem>>, vector<8x13xf32>
    %c0_1 = arith.constant 0 : index
    %c0_2 = arith.constant 0 : index
    %1 = vector.load %arg2[%c0_1, %c0_2] : memref<8x13xf32, #tpu.memory_space<vmem>>, vector<8x13xf32>
    tpu.vector_store %arg2[%c0_1, %c0_2], %0 {strides = array<i32>} : memref<8x13xf32, #tpu.memory_space<vmem>>, vector<8x13xf32>,
    return
  }
  func.func @transform_0(%arg0: i32) -> (i32, i32) {
    %c0_i32 = arith.constant 0 : i32
    %c0_i32_0 = arith.constant 0 : i32
    return %arg0, %c0_i32 : i32, i32
  }
  func.func @transform_1(%arg0: i32) -> (i32, i32) {
    %c0_i32 = arith.constant 0 : i32
    %c0_i32_0 = arith.constant 0 : i32
    return %arg0, %c0_i32 : i32, i32
  }
}

</mosaic_0001>

<llo_original>
// kernel: tpu_custom_call.1
$region0: #{tpu_custom_call.1}
  #allocation0 [shape = 'u32[]', space=smem, size = 0x4, offset = 0x4, fixed_abs, tag = 'smem constant byte address 0x4 - core index']
  #allocation1 [shape = 'u32[144,128]{1,0:T(1,128)}', space=vmem, size = 0x12000, scoped, tag = 'internal scratch']
  %s0 = inlined_call_operand.hbm [shape: f32[8,16], index: 0, kind: input, shape index: {}]
  %s1 = inlined_call_operand.hbm [shape: f32[8,13], index: 1, kind: output, shape index: {}]
  %s2 = sld [smem:[#allocation0]]
  $region18: #{tpu_custom_call.1} parent=0
    _
  %s4 = ssub.s32 1, %s2
  %s5 = scalar_select 0, %s4, %s2
  $region1: #{tpu_custom_call.1} parent=0
    #allocation2 [shape = 'u8[4096]{0}', space=vmem, size = 0x1000, scoped, tag = 'input window, operand 0, single buffered']
    #allocation3 [shape = 's32[1]{0}', space=sflag, size = 0x4, scoped, tag = 'scoped memory for tpu_custom_call.1']
    #allocation4 [shape = 's32[1]{0}', space=sflag, size = 0x4, scoped, tag = 'scoped memory for tpu_custom_call.1']
    #allocation5 [shape = 'u8[4096]{0}', space=vmem, size = 0x1000, scoped, tag = 'output window, operand 0, single buffered']
    %6 = vsyncpa [#allocation3], 0
    %7 = vsyncpa [#allocation4], 0
    // Predicated region
    $region2: #{tpu_custom_call.1} parent=1 // pred_check
      _
    $region3: #{tpu_custom_call.1} parent=1 // pred_check_branch
      %9 = sbr.rel (0) target = $region5
    $region4: #{tpu_custom_call.1} parent=1 // pred_region
      %s11 = ssub.s32 128, 128
      %12 = vsyncadd [#allocation3], %s11
      %s14 = sshll.u32 [#allocation2], 4
      %s15 = int_to_ptr.vmem [resolvable:$true] %s14
      %17 = dma.hbm_to_vmem [thread:$0]  %s0, 128, %s15, [#allocation3]
    $region5: #{tpu_custom_call.1} parent=1 // pred_fallthru
      _
    // Predicated region
    $region6: #{tpu_custom_call.1} parent=1 // pred_check
      _
    $region7: #{tpu_custom_call.1} parent=1 // pred_check_branch
      %19 = sbr.rel (0) target = $region9
    $region8: #{tpu_custom_call.1} parent=1 // pred_region
      %20 = dma.done [#allocation3], 128
    $region9: #{tpu_custom_call.1} parent=1 // pred_fallthru
      _
    %v21 = vld [vmem:[#allocation2] sm:$0xff]
    %vm22 = vcmask 105472
    %23 = vst.msk [vmem:[#allocation5] sm:$0xff] %vm22, %v21
    // Predicated region
    $region10: #{tpu_custom_call.1} parent=1 // pred_check
      _
    $region11: #{tpu_custom_call.1} parent=1 // pred_check_branch
      %25 = sbr.rel (0) target = $region13
    $region12: #{tpu_custom_call.1} parent=1 // pred_region
      %s27 = ssub.s32 128, 128
      %28 = vsyncadd [#allocation4], %s27
      %s30 = sshll.u32 [#allocation5], 4
      %s31 = int_to_ptr.vmem [resolvable:$true] %s30
      %33 = dma.vmem_to_hbm [thread:$0]  %s31, 128, %s1, [#allocation4]
    $region13: #{tpu_custom_call.1} parent=1 // pred_fallthru
      _
    // Predicated region
    $region14: #{tpu_custom_call.1} parent=1 // pred_check
      _
    $region15: #{tpu_custom_call.1} parent=1 // pred_check_branch
      %35 = sbr.rel (0) target = $region17
    $region16: #{tpu_custom_call.1} parent=1 // pred_region
      %36 = dma.done [#allocation4], 128
    $region17: #{tpu_custom_call.1} parent=1 // pred_fallthru
      _
    %37 = vsyncpa [#allocation3], 1
    %38 = vsyncpa [#allocation4], 1

</llo_original>
